<compile_context>
chip_gen: v5e
topology: v5e:2x2
jax: 0.10.0
libtpu: 0.0.40
codegen_flags: <defaults>
</compile_context>

<pallas_src>
import jax
import jax.numpy as jnp
from jax.experimental import pallas as pl
from jax.experimental.pallas import tpu as pltpu


def _round_up(v, m):
    return ((v + m - 1) // m) * m


def encoder_kernel(x_ref, w1_ref, b1_ref, w2_ref, b2_ref, o_ref, h_ref):
    # x_ref : (TM, num_inputs)   batch tile (compute dtype: bf16 or f32)
    # w1_ref: (num_inputs, 512)  resident weight (compute dtype)
    # b1_ref: (1, 512)           f32
    # w2_ref: (512, 256)         resident weight (compute dtype)
    # b2_ref: (1, 256)           f32
    # o_ref : (TM, 256)          f32 output tile
    # h_ref : (TM, 512)          f32 VMEM scratch for the hidden activation
    h = jnp.dot(x_ref[...], w1_ref[...], preferred_element_type=jnp.float32)
    h_ref[...] = jnp.maximum(h + b1_ref[...], 0.0)          # bias + ReLU in f32 on VPU
    # Cast the staged hidden back to the matmul operand dtype so the second GEMM
    # runs at the bf16 MXU rate (no-op cast on the f32 path).
    y = jnp.dot(h_ref[...].astype(w2_ref.dtype), w2_ref[...],
                preferred_element_type=jnp.float32)
    o_ref[...] = jnp.maximum(y + b2_ref[...], 0.0).astype(o_ref.dtype)


def encoder_forward(x, w1, b1, w2, b2, *, tm=512, compute_dtype=jnp.bfloat16):
    """Fused MLP forward.

    x : (B, num_inputs) f32.  w1: (num_inputs, 512), w2: (512, 256) (pre-transposed
    vs. torch's (out, in)).  Returns (B, embed) f32.
    """
    B, num_inputs = x.shape
    hidden = w1.shape[1]
    embed = w2.shape[1]

    # --- tile / grid selection ------------------------------------------------
    # Sublane granule: bf16 packs 16 rows per vreg, f32 packs 8.
    granule = 16 if jnp.dtype(compute_dtype).itemsize < 4 else 8
    # Keep >=2 grid steps whenever the batch allows it (v7x megacore split),
    # cap the tile at `tm` (256-512 rows keeps the MXU and HBM pipe full).
    half = _round_up(max((B + 1) // 2, 1), granule)
    tm_eff = max(granule, min(_round_up(tm, granule), half))
    B_pad = _round_up(B, tm_eff)
    grid = (B_pad // tm_eff,)

    # --- operand prep (wrapper glue, not hot-path) -----------------------------
    xc = x.astype(compute_dtype)
    if B_pad != B:
        xc = jnp.pad(xc, ((0, B_pad - B), (0, 0)))
    w1c = w1.astype(compute_dtype)
    w2c = w2.astype(compute_dtype)
    b1_2d = b1.reshape(1, hidden).astype(jnp.float32)
    b2_2d = b2.reshape(1, embed).astype(jnp.float32)

    cost = pl.CostEstimate(
        flops=2 * B_pad * (num_inputs * hidden + hidden * embed),
        transcendentals=0,
        bytes_accessed=(
            xc.size * xc.dtype.itemsize
            + w1c.size * w1c.dtype.itemsize
            + w2c.size * w2c.dtype.itemsize
            + (b1_2d.size + b2_2d.size) * 4
            + B_pad * embed * 4
        ),
    )

    # NOTE: the constant index_map keeps W1/b1/W2/b2 resident across grid steps
    # (no re-DMA).  Their default double-buffering only reserves ~0.6 MiB extra,
    # which is negligible against the 32 MiB scoped-VMEM budget, so we do not
    # force pl.Buffered(1) here.
    out = pl.pallas_call(
        encoder_kernel,
        out_shape=jax.ShapeDtypeStruct((B_pad, embed), jnp.float32),
        grid_spec=pltpu.PrefetchScalarGridSpec(
            num_scalar_prefetch=0,
            grid=grid,
            in_specs=[
                pl.BlockSpec((tm_eff, num_inputs), lambda i: (i, 0)),     # x tile
                pl.BlockSpec((num_inputs, hidden), lambda i: (0, 0)),     # W1 (whole)
                pl.BlockSpec((1, hidden), lambda i: (0, 0)),              # b1
                pl.BlockSpec((hidden, embed), lambda i: (0, 0)),          # W2 (whole)
                pl.BlockSpec((1, embed), lambda i: (0, 0)),               # b2
            ],
            out_specs=pl.BlockSpec((tm_eff, embed), lambda i: (i, 0)),
            scratch_shapes=[pltpu.VMEM((tm_eff, hidden), jnp.float32)],   # staged h
        ),
        compiler_params=pltpu.CompilerParams(
            dimension_semantics=("parallel",),
        ),
        cost_estimate=cost,
    )(xc, w1c, b1_2d, w2c, b2_2d)

    return out[:B] if B_pad != B else out


def init_encoder_params(key, num_inputs, embed_size=256, hidden=512):
    """Deterministic init mimicking nn.Linear default (uniform +/- 1/sqrt(fan_in)).

    Weights returned pre-transposed: (in, out)."""
    k1, k2, k3, k4 = jax.random.split(key, 4)
    bound1 = 1.0 / jnp.sqrt(jnp.float32(num_inputs))
    bound2 = 1.0 / jnp.sqrt(jnp.float32(hidden))
    w1 = jax.random.uniform(k1, (num_inputs, hidden), jnp.float32, -bound1, bound1)
    b1 = jax.random.uniform(k2, (hidden,), jnp.float32, -bound1, bound1)
    w2 = jax.random.uniform(k3, (hidden, embed_size), jnp.float32, -bound2, bound2)
    b2 = jax.random.uniform(k4, (embed_size,), jnp.float32, -bound2, bound2)
    return w1, b1, w2, b2


if __name__ == "__main__":
    key = jax.random.PRNGKey(0)
    k_params, k_x = jax.random.split(key)

    B = 16            # small test batch
    num_inputs = 32   # small input feature dim
    embed_size = 256
    hidden = 512

    w1, b1, w2, b2 = init_encoder_params(k_params, num_inputs, embed_size, hidden)
    x = jax.random.normal(k_x, (B, num_inputs), jnp.float32)

    # Pure-JAX f32 reference (matches the PyTorch module).
    ref = jnp.maximum(x @ w1 + b1, 0.0)
    ref = jnp.maximum(ref @ w2 + b2, 0.0)

    # 1) Exact-f32 path: tight tolerance vs the f32 reference.
    out_f32 = jax.block_until_ready(
        encoder_forward(x, w1, b1, w2, b2, compute_dtype=jnp.float32))
    assert out_f32.shape == (B, embed_size)
    assert jnp.allclose(out_f32, ref, atol=1e-5, rtol=1e-5), "f32 path mismatch"

    # 2) Default bf16-operand path (f32 accumulation): compare vs a
    #    bf16-operand reference with a loosened tolerance.
    out_bf16 = jax.block_until_ready(encoder_forward(x, w1, b1, w2, b2))
    xb = x.astype(jnp.bfloat16).astype(jnp.float32)
    w1b = w1.astype(jnp.bfloat16).astype(jnp.float32)
    w2b = w2.astype(jnp.bfloat16).astype(jnp.float32)
    hb = jnp.maximum(xb @ w1b + b1, 0.0)
    refb = jnp.maximum(hb.astype(jnp.bfloat16).astype(jnp.float32) @ w2b + b2, 0.0)
    assert out_bf16.shape == (B, embed_size)
    assert jnp.allclose(out_bf16, refb, atol=2e-2, rtol=2e-2), "bf16 path mismatch"
    assert jnp.allclose(out_bf16, ref, atol=1e-1, rtol=1e-1), "bf16 vs f32 drift too large"

    # 3) Ragged batch (B=13): remainder handled by wrapper padding + slice.
    out13 = jax.block_until_ready(encoder_forward(x[:13], w1, b1, w2, b2))
    assert out13.shape == (13, embed_size)
    assert jnp.allclose(out13, refb[:13], atol=2e-2, rtol=2e-2), "ragged batch mismatch"

    print("KERNEL_OK")
</pallas_src>

<mosaic_0001>
module attributes {stable_mosaic.version = 11 : i64} {
  func.func @encoder_kernel(%arg0: i32, %arg1: memref<8x32xf32, #tpu.memory_space<vmem>>, %arg2: memref<32x512xf32, #tpu.memory_space<vmem>>, %arg3: memref<1x512xf32, #tpu.memory_space<vmem>>, %arg4: memref<512x256xf32, #tpu.memory_space<vmem>>, %arg5: memref<1x256xf32, #tpu.memory_space<vmem>>, %arg6: memref<8x256xf32, #tpu.memory_space<vmem>>, %arg7: memref<8x512xf32, #tpu.memory_space<vmem>>) attributes {dimension_semantics = [#tpu.dimension_semantics<parallel>], iteration_bounds = array<i64: 2>, scalar_prefetch = 0 : i64, scratch_operands = 1 : i64, tpu.core_type = #tpu.core_type<tc>, window_params = [{transform_indices = @transform_0, window_bounds = array<i64: 8, 32>}, {pipeline_mode = #tpu.pipeline_mode<synchronous>, transform_indices = @transform_1, window_bounds = array<i64: 32, 512>}, {pipeline_mode = #tpu.pipeline_mode<synchronous>, transform_indices = @transform_2, window_bounds = array<i64: 1, 512>}, {pipeline_mode = #tpu.pipeline_mode<synchronous>, transform_indices = @transform_3, window_bounds = array<i64: 512, 256>}, {pipeline_mode = #tpu.pipeline_mode<synchronous>, transform_indices = @transform_4, window_bounds = array<i64: 1, 256>}, {transform_indices = @transform_5, window_bounds = array<i64: 8, 256>}]} {
    %c0 = arith.constant 0 : index
    %c0_0 = arith.constant 0 : index
    %0 = vector.load %arg1[%c0, %c0_0] : memref<8x32xf32, #tpu.memory_space<vmem>>, vector<8x32xf32>
    %c0_1 = arith.constant 0 : index
    %c0_2 = arith.constant 0 : index
    %1 = vector.load %arg2[%c0_1, %c0_2] : memref<32x512xf32, #tpu.memory_space<vmem>>, vector<32x512xf32>
    %cst = arith.constant dense<0.000000e+00> : vector<8x512xf32>
    %2 = tpu.matmul %0, %1, %cst {dimension_numbers = #tpu.dot_dimension_numbers<[1], [0], [0], [1], [0, 0, 1, 1], [], []>} : vector<8x32xf32>, vector<32x512xf32>, vector<8x512xf32> -> vector<8x512xf32>
    %c0_3 = arith.constant 0 : index
    %c0_4 = arith.constant 0 : index
    %3 = vector.load %arg3[%c0_3, %c0_4] : memref<1x512xf32, #tpu.memory_space<vmem>>, vector<1x512xf32>
    %4 = vector.broadcast %3 : vector<1x512xf32> to vector<8x512xf32>
    %5 = arith.addf %2, %4 : vector<8x512xf32>
    %cst_5 = arith.constant 0.000000e+00 : f32
    %6 = vector.broadcast %cst_5 : f32 to vector<8x512xf32>
    %7 = arith.maximumf %5, %6 : vector<8x512xf32>
    %c0_6 = arith.constant 0 : index
    %c0_7 = arith.constant 0 : index
    %8 = vector.load %arg7[%c0_6, %c0_7] : memref<8x512xf32, #tpu.memory_space<vmem>>, vector<8x512xf32>
    tpu.vector_store %arg7[%c0_6, %c0_7], %7 {strides = array<i32>} : memref<8x512xf32, #tpu.memory_space<vmem>>, vector<8x512xf32>,
    %c0_8 = arith.constant 0 : index
    %c0_9 = arith.constant 0 : index
    %9 = vector.load %arg7[%c0_8, %c0_9] : memref<8x512xf32, #tpu.memory_space<vmem>>, vector<8x512xf32>
    %c0_10 = arith.constant 0 : index
    %c0_11 = arith.constant 0 : index
    %10 = vector.load %arg4[%c0_10, %c0_11] : memref<512x256xf32, #tpu.memory_space<vmem>>, vector<512x256xf32>
    %cst_12 = arith.constant dense<0.000000e+00> : vector<8x256xf32>
    %11 = tpu.matmul %9, %10, %cst_12 {dimension_numbers = #tpu.dot_dimension_numbers<[1], [0], [0], [1], [0, 0, 1, 1], [], []>} : vector<8x512xf32>, vector<512x256xf32>, vector<8x256xf32> -> vector<8x256xf32>
    %c0_13 = arith.constant 0 : index
    %c0_14 = arith.constant 0 : index
    %12 = vector.load %arg5[%c0_13, %c0_14] : memref<1x256xf32, #tpu.memory_space<vmem>>, vector<1x256xf32>
    %13 = vector.broadcast %12 : vector<1x256xf32> to vector<8x256xf32>
    %14 = arith.addf %11, %13 : vector<8x256xf32>
    %cst_15 = arith.constant 0.000000e+00 : f32
    %15 = vector.broadcast %cst_15 : f32 to vector<8x256xf32>
    %16 = arith.maximumf %14, %15 : vector<8x256xf32>
    %c0_16 = arith.constant 0 : index
    %c0_17 = arith.constant 0 : index
    %17 = vector.load %arg6[%c0_16, %c0_17] : memref<8x256xf32, #tpu.memory_space<vmem>>, vector<8x256xf32>
    tpu.vector_store %arg6[%c0_16, %c0_17], %16 {strides = array<i32>} : memref<8x256xf32, #tpu.memory_space<vmem>>, vector<8x256xf32>,
    return
  }
  func.func @transform_0(%arg0: i32) -> (i32, i32) {
    %c0_i32 = arith.constant 0 : i32
    %c0_i32_0 = arith.constant 0 : i32
    return %arg0, %c0_i32 : i32, i32
  }
  func.func @transform_1(%arg0: i32) -> (i32, i32) {
    %c0_i32 = arith.constant 0 : i32
    %c0_i32_0 = arith.constant 0 : i32
    %c0_i32_1 = arith.constant 0 : i32
    return %c0_i32, %c0_i32_0 : i32, i32
  }
  func.func @transform_2(%arg0: i32) -> (i32, i32) {
    %c0_i32 = arith.constant 0 : i32
    %c0_i32_0 = arith.constant 0 : i32
    %c0_i32_1 = arith.constant 0 : i32
    return %c0_i32, %c0_i32_0 : i32, i32
  }
  func.func @transform_3(%arg0: i32) -> (i32, i32) {
    %c0_i32 = arith.constant 0 : i32
    %c0_i32_0 = arith.constant 0 : i32
    %c0_i32_1 = arith.constant 0 : i32
    return %c0_i32, %c0_i32_0 : i32, i32
  }
  func.func @transform_4(%arg0: i32) -> (i32, i32) {
    %c0_i32 = arith.constant 0 : i32
    %c0_i32_0 = arith.constant 0 : i32
    %c0_i32_1 = arith.constant 0 : i32
    return %c0_i32, %c0_i32_0 : i32, i32
  }
  func.func @transform_5(%arg0: i32) -> (i32, i32) {
    %c0_i32 = arith.constant 0 : i32
    %c0_i32_0 = arith.constant 0 : i32
    return %arg0, %c0_i32 : i32, i32
  }
}

</mosaic_0001>

<llo_original>
// kernel: tpu_custom_call.1
$region0: #{tpu_custom_call.1}
  #allocation0 [shape = 'u32[]', space=smem, size = 0x4, offset = 0x4, fixed_abs, tag = 'smem constant byte address 0x4 - core index']
  #allocation1 [shape = 'u32[72,128]{1,0:T(1,128)}', space=vmem, size = 0x9000, scoped, tag = 'internal scratch']
  #allocation2 [shape = 'f32[8,512]{1,0:T(8,128)}', space=vmem, size = 0x4000, scoped, tag = 'scratch operand']
  %s0 = inlined_call_operand.hbm [shape: f32[16,32], index: 0, kind: input, shape index: {}]
  %s1 = inlined_call_operand.hbm [shape: f32[32,512], index: 1, kind: input, shape index: {}]
  %s2 = inlined_call_operand.hbm [shape: f32[1,512], index: 2, kind: input, shape index: {}]
  %s3 = inlined_call_operand.hbm [shape: f32[512,256], index: 3, kind: input, shape index: {}]
  %s4 = inlined_call_operand.vmem [shape: f32[1,256], index: 4, kind: input, shape index: {}]
  %s5 = inlined_call_operand.hbm [shape: f32[16,256], index: 5, kind: output, shape index: {}]
  %s6 = sld [smem:[#allocation0]]
  $region69: #{tpu_custom_call.1} parent=0
    _
  %s8 = ssub.s32 1, %s6
  %s9 = scalar_select 0, %s8, %s6
  $region1: #{tpu_custom_call.1} parent=0
    #allocation3 [shape = 'u8[8192]{0}', space=vmem, size = 0x2000, scoped, tag = 'input window, operand 0']
    #allocation4 [shape = 's32[2]{0}', space=sflag, size = 0x8, scoped, tag = 'scoped memory for tpu_custom_call.1']
    #allocation5 [shape = 's32[2]{0}', space=sflag, size = 0x8, scoped, tag = 'scoped memory for tpu_custom_call.1']
    #allocation6 [shape = 'u8[65536]{0}', space=vmem, size = 0x10000, scoped, tag = 'input window, operand 1, single buffered']
    #allocation7 [shape = 's32[1]{0}', space=sflag, size = 0x4, scoped, tag = 'scoped memory for tpu_custom_call.1']
    #allocation8 [shape = 'u8[2048]{0}', space=vmem, size = 0x800, scoped, tag = 'input window, operand 2, single buffered']
    #allocation9 [shape = 'u8[524288]{0}', space=vmem, size = 0x80000, scoped, tag = 'input window, operand 3, single buffered']
    #allocation10 [shape = 's32[1]{0}', space=sflag, size = 0x4, scoped, tag = 'scoped memory for tpu_custom_call.1']
    #allocation11 [shape = 'u8[16384]{0}', space=vmem, size = 0x4000, scoped, tag = 'output window, operand 0']
    %10 = vsyncpa [#allocation4], 0
    %s11 = scalar_lea.sflag [#allocation4], 1
    %12 = vsyncpa %s11, 0
    %13 = vsyncpa [#allocation7], 0
    %14 = vsyncpa [#allocation10], 0
    %15 = vsyncpa [#allocation5], 0
    %s16 = scalar_lea.sflag [#allocation5], 1
    %17 = vsyncpa %s16, 0
    loop: start=0, step=1, limit=4
    $region2: #{tpu_custom_call.1} parent=1 // loop_pre_header
      _
    $region3: #{tpu_custom_call.1} parent=1 // loop_header
      %s19 = sphi 0, %s23
      %p20 = scmp.ge.s32.totalorder %s19, 4
      %s29 = sphi 0, %s31
      %s32 = sphi 0, %s29
      %s33 = sphi 0, %s32
      %s49 = sphi 0, %s33
      %s53 = sphi 0, %s53
      %s55 = sphi 0, %s53
      %s56 = sphi 0, %s55
      %s70 = sphi 0, %s56
      %s74 = sphi 0, %s74
      %s76 = sphi 0, %s74
      %s77 = sphi 0, %s76
      %s91 = sphi 0, %s77
      %s95 = sphi 0, %s95
      %s97 = sphi 0, %s95
      %s98 = sphi 0, %s97
      %s112 = sphi 0, %s98
      %s116 = sphi 0, %s116
      %s118 = sphi 0, %s116
      %s119 = sphi 0, %s118
      %s133 = sphi 0, %s119
      %s139 = sphi 0, %s141
      %s142 = sphi 0, %s139
      %s143 = sphi 0, %s142
      %s159 = sphi 0, %s143
    $region4: #{tpu_custom_call.1} parent=1 // loop_header_branch
      %22 = sbr.rel (%p20) target = $region8
    $region5: #{tpu_custom_call.1} parent=1 // loop_body
      %s24 = ssub.s32 %s19, 1
      %s25 = ssub.s32 %s19, 2
      %s26 = sadd.s32 %s19, 1
      %s27 = ssub.s32 %s19, %s26
      %p28 = scmp.eq.s32.totalorder %s27, 0
      %s30 = sadd.s32 %s29, 1
      %s31 = scalar_select %p28, %s29, %s30
      %p34 = pneg %p28
      %p35 = scmp.eq.s32.totalorder %s19, 1
      %p36 = por %p34, %p35
      %p37 = scmp.ne.s32.totalorder %s29, %s32
      %p38 = scmp.eq.s32.totalorder %s19, 0
      %p39 = por %p37, %p38
      %p40 = scmp.ne.s32.totalorder %s29, %s32
      %p41 = scmp.eq.s32.totalorder %s24, 1
      %p42 = por %p40, %p41
      %p43 = scmp.ne.s32.totalorder %s32, %s33
      %p44 = scmp.eq.s32.totalorder %s24, 0
      %p45 = por %p43, %p44
      %p46 = scmp.ne.s32.totalorder %s32, %s33
      %p47 = scmp.eq.s32.totalorder %s25, 1
      %p48 = por %p46, %p47
      %p50 = scmp.ne.s32.totalorder %s33, %s49
      %p51 = scmp.eq.s32.totalorder %s25, 0
      %p52 = por %p50, %p51
      %s54 = sadd.s32 %s53, 1
      %p57 = scmp.eq.s32.totalorder %s19, 1
      %p58 = scmp.ne.s32.totalorder %s53, %s55
      %p59 = scmp.eq.s32.totalorder %s19, 0
      %p60 = por %p58, %p59
      %p61 = scmp.ne.s32.totalorder %s53, %s55
      %p62 = scmp.eq.s32.totalorder %s24, 1
      %p63 = por %p61, %p62
      %p64 = scmp.ne.s32.totalorder %s55, %s56
      %p65 = scmp.eq.s32.totalorder %s24, 0
      %p66 = por %p64, %p65
      %p67 = scmp.ne.s32.totalorder %s55, %s56
      %p68 = scmp.eq.s32.totalorder %s25, 1
      %p69 = por %p67, %p68
      %p71 = scmp.ne.s32.totalorder %s56, %s70
      %p72 = scmp.eq.s32.totalorder %s25, 0
      %p73 = por %p71, %p72
      %s75 = sadd.s32 %s74, 1
      %p78 = scmp.eq.s32.totalorder %s19, 1
      %p79 = scmp.ne.s32.totalorder %s74, %s76
      %p80 = scmp.eq.s32.totalorder %s19, 0
      %p81 = por %p79, %p80
      %p82 = scmp.ne.s32.totalorder %s74, %s76
      %p83 = scmp.eq.s32.totalorder %s24, 1
      %p84 = por %p82, %p83
      %p85 = scmp.ne.s32.totalorder %s76, %s77
      %p86 = scmp.eq.s32.totalorder %s24, 0
      %p87 = por %p85, %p86
      %p88 = scmp.ne.s32.totalorder %s76, %s77
      %p89 = scmp.eq.s32.totalorder %s25, 1
      %p90 = por %p88, %p89
      %p92 = scmp.ne.s32.totalorder %s77, %s91
      %p93 = scmp.eq.s32.totalorder %s25, 0
      %p94 = por %p92, %p93
      %s96 = sadd.s32 %s95, 1
      %p99 = scmp.eq.s32.totalorder %s19, 1
      %p100 = scmp.ne.s32.totalorder %s95, %s97
      %p101 = scmp.eq.s32.totalorder %s19, 0
      %p102 = por %p100, %p101
      %p103 = scmp.ne.s32.totalorder %s95, %s97
      %p104 = scmp.eq.s32.totalorder %s24, 1
      %p105 = por %p103, %p104
      %p106 = scmp.ne.s32.totalorder %s97, %s98
      %p107 = scmp.eq.s32.totalorder %s24, 0
      %p108 = por %p106, %p107
      %p109 = scmp.ne.s32.totalorder %s97, %s98
      %p110 = scmp.eq.s32.totalorder %s25, 1
      %p111 = por %p109, %p110
      %p113 = scmp.ne.s32.totalorder %s98, %s112
      %p114 = scmp.eq.s32.totalorder %s25, 0
      %p115 = por %p113, %p114
      %s117 = sadd.s32 %s116, 1
      %p120 = scmp.eq.s32.totalorder %s19, 1
      %p121 = scmp.ne.s32.totalorder %s116, %s118
      %p122 = scmp.eq.s32.totalorder %s19, 0
      %p123 = por %p121, %p122
      %p124 = scmp.ne.s32.totalorder %s116, %s118
      %p125 = scmp.eq.s32.totalorder %s24, 1
      %p126 = por %p124, %p125
      %p127 = scmp.ne.s32.totalorder %s118, %s119
      %p128 = scmp.eq.s32.totalorder %s24, 0
      %p129 = por %p127, %p128
      %p130 = scmp.ne.s32.totalorder %s118, %s119
      %p131 = scmp.eq.s32.totalorder %s25, 1
      %p132 = por %p130, %p131
      %p134 = scmp.ne.s32.totalorder %s119, %s133
      %p135 = scmp.eq.s32.totalorder %s25, 0
      %p136 = por %p134, %p135
      %s137 = ssub.s32 %s19, %s26
      %p138 = scmp.eq.s32.totalorder %s137, 0
      %s140 = sadd.s32 %s139, 1
      %s141 = scalar_select %p138, %s139, %s140
      %p144 = pneg %p138
      %p145 = scmp.eq.s32.totalorder %s19, 1
      %p146 = por %p144, %p145
      %p147 = scmp.ne.s32.totalorder %s139, %s142
      %p148 = scmp.eq.s32.totalorder %s19, 0
      %p149 = por %p147, %p148
      %p150 = scmp.ne.s32.totalorder %s139, %s142
      %p151 = scmp.eq.s32.totalorder %s24, 1
      %p152 = por %p150, %p151
      %p153 = scmp.ne.s32.totalorder %s142, %s143
      %p154 = scmp.eq.s32.totalorder %s24, 0
      %p155 = por %p153, %p154
      %p156 = scmp.ne.s32.totalorder %s142, %s143
      %p157 = scmp.eq.s32.totalorder %s25, 1
      %p158 = por %p156, %p157
      %p160 = scmp.ne.s32.totalorder %s143, %s159
      %p161 = scmp.eq.s32.totalorder %s25, 0
      %p162 = por %p160, %p161
      %p163 = scmp.le.s32.totalorder 1, %s19
      %p164 = scmp.lt.s32.totalorder %s19, 3
      %p165 = pnand %p163, %p164
      %p166 = pneg %p165
      // Predicated region
      $region9: #{tpu_custom_call.1} parent=5 // pred_check
        _
      $region10: #{tpu_custom_call.1} parent=5 // pred_check_branch
        %168 = sbr.rel (%p165) target = $region12
      $region11: #{tpu_custom_call.1} parent=5 // pred_region
        %s169 = ssub.s32 %s19, 1
        // Predicated region
        $region13: #{tpu_custom_call.1} parent=11 // pred_check
          %p170 = pneg %p66
        $region14: #{tpu_custom_call.1} parent=11 // pred_check_branch
          %172 = sbr.rel (%p170) target = $region16
        $region15: #{tpu_custom_call.1} parent=11 // pred_region
          %174 = vsyncadd [#allocation7], 0
          %s175 = sshll.u32 %s1, 4
          %s176 = int_to_ptr.hbm [resolvable:$true] %s175
          %s177 = sshll.u32 [#allocation6], 4
          %s178 = int_to_ptr.vmem [resolvable:$true] %s177
          %183 = dma.hbm_to_vmem [thread:$0]  %s176, 2048, %s178, [#allocation7], 512, 512, 32
        $region16: #{tpu_custom_call.1} parent=11 // pred_fallthru
          _
        // Predicated region
        $region17: #{tpu_custom_call.1} parent=11 // pred_check
          %p184 = pneg %p87
        $region18: #{tpu_custom_call.1} parent=11 // pred_check_branch
          %186 = sbr.rel (%p184) target = $region20
        $region19: #{tpu_custom_call.1} parent=11 // pred_region
          %188 = vsyncadd [#allocation7], 0
          %s190 = sshll.u32 %s2, 4
          %s191 = int_to_ptr.hbm [resolvable:$true] %s190
          %s192 = sshll.u32 [#allocation8], 4
          %s193 = int_to_ptr.vmem [resolvable:$true] %s192
          %195 = dma.hbm_to_vmem [thread:$0]  %s191, 64, %s193, [#allocation7]
        $region20: #{tpu_custom_call.1} parent=11 // pred_fallthru
          _
        // Predicated region
        $region21: #{tpu_custom_call.1} parent=11 // pred_check
          %p196 = pneg %p108
        $region22: #{tpu_custom_call.1} parent=11 // pred_check_branch
          %198 = sbr.rel (%p196) target = $region24
        $region23: #{tpu_custom_call.1} parent=11 // pred_region
          %200 = vsyncadd [#allocation10], 0
          %s201 = sshll.u32 %s3, 4
          %s202 = int_to_ptr.hbm [resolvable:$true] %s201
          %s203 = sshll.u32 [#allocation9], 4
          %s204 = int_to_ptr.vmem [resolvable:$true] %s203
          %209 = dma.hbm_to_vmem [thread:$0]  %s202, 16384, %s204, [#allocation10], 256, 256, 16
        $region24: #{tpu_custom_call.1} parent=11 // pred_fallthru
          _
        // Predicated region
        $region25: #{tpu_custom_call.1} parent=11 // pred_check
          %p210 = pneg %p129
        $region26: #{tpu_custom_call.1} parent=11 // pred_check_branch
          %212 = sbr.rel (%p210) target = $region28
        $region27: #{tpu_custom_call.1} parent=11 // pred_region
          _
        $region28: #{tpu_custom_call.1} parent=11 // pred_fallthru
          _
      $region12: #{tpu_custom_call.1} parent=5 // pred_fallthru
        _
      %p213 = scmp.lt.s32.totalorder %s19, 2
      // Predicated region
      $region29: #{tpu_custom_call.1} parent=5 // pred_check
        %p214 = pneg %p213
      $region30: #{tpu_custom_call.1} parent=5 // pred_check_branch
        %216 = sbr.rel (%p214) target = $region32
      $region31: #{tpu_custom_call.1} parent=5 // pred_region
        // Predicated region
        $region33: #{tpu_custom_call.1} parent=31 // pred_check
          %p217 = pneg %p39
        $region34: #{tpu_custom_call.1} parent=31 // pred_check_branch
          %219 = sbr.rel (%p217) target = $region36
        $region35: #{tpu_custom_call.1} parent=31 // pred_region
          %s220 = sand.u32 %s29, 1
          %s221 = scalar_lea.sflag [#allocation4], %s220
          %s222 = sand.u32 %s29, 1
          %s223 = smul.addr %s222, 8
          %s224 = scalar_lea.vmem [#allocation3], %s223
          %226 = vsyncadd %s221, 0
          %s227 = smul.addr %s19, 8
          %s228 = scalar_lea.hbm %s0, %s227
          %s230 = sshll.u32 %s228, 4
          %s231 = int_to_ptr.hbm [resolvable:$true] %s230
          %s232 = sshll.u32 %s224, 4
          %s233 = int_to_ptr.vmem [resolvable:$true] %s232
          %235 = dma.hbm_to_vmem [thread:$0]  %s231, 128, %s233, %s221
        $region36: #{tpu_custom_call.1} parent=31 // pred_fallthru
          _
      $region32: #{tpu_custom_call.1} parent=5 // pred_fallthru
        _
      %p236 = scmp.le.s32.totalorder 1, %s19
      %p237 = scmp.lt.s32.totalorder %s19, 3
      %p238 = pnand %p236, %p237
      %p239 = pneg %p238
      // Predicated region
      $region37: #{tpu_custom_call.1} parent=5 // pred_check
        _
      $region38: #{tpu_custom_call.1} parent=5 // pred_check_branch
        %241 = sbr.rel (%p238) target = $region40
      $region39: #{tpu_custom_call.1} parent=5 // pred_region
        %s242 = ssub.s32 %s19, 1
        %s243 = sand.u32 %s32, 1
        %s244 = scalar_lea.sflag [#allocation4], %s243
        %s245 = sand.u32 %s32, 1
        %s246 = smul.addr %s245, 8
        %s247 = scalar_lea.vmem [#allocation3], %s246
        // Predicated region
        $region41: #{tpu_custom_call.1} parent=39 // pred_check
          %p248 = pneg %p45
        $region42: #{tpu_custom_call.1} parent=39 // pred_check_branch
          %250 = sbr.rel (%p248) target = $region44
        $region43: #{tpu_custom_call.1} parent=39 // pred_region
          %252 = dma.done %s244, 128
        $region44: #{tpu_custom_call.1} parent=39 // pred_fallthru
          _
        // Predicated region
        $region45: #{tpu_custom_call.1} parent=39 // pred_check
          %p253 = pneg %p66
        $region46: #{tpu_custom_call.1} parent=39 // pred_check_branch
          %255 = sbr.rel (%p253) target = $region48
        $region47: #{tpu_custom_call.1} parent=39 // pred_region
          %257 = dma.done [#allocation7], 2048
        $region48: #{tpu_custom_call.1} parent=39 // pred_fallthru
          _
        // Predicated region
        $region49: #{tpu_custom_call.1} parent=39 // pred_check
          %p258 = pneg %p87
        $region50: #{tpu_custom_call.1} parent=39 // pred_check_branch
          %260 = sbr.rel (%p258) target = $region52
        $region51: #{tpu_custom_call.1} parent=39 // pred_region
          %262 = dma.done [#allocation7], 64
        $region52: #{tpu_custom_call.1} parent=39 // pred_fallthru
          _
        // Predicated region
        $region53: #{tpu_custom_call.1} parent=39 // pred_check
          %p263 = pneg %p108
        $region54: #{tpu_custom_call.1} parent=39 // pred_check_branch
          %265 = sbr.rel (%p263) target = $region56
        $region55: #{tpu_custom_call.1} parent=39 // pred_region
          %267 = dma.done [#allocation10], 16384
        $region56: #{tpu_custom_call.1} parent=39 // pred_fallthru
          _
        %s268 = sand.u32 %s32, 1
        %s269 = scalar_lea.sflag [#allocation4], %s268
        %s270 = sand.u32 %s32, 1
        %s271 = smul.addr %s270, 8
        %s272 = scalar_lea.vmem [#allocation3], %s271
        %p273 = pneg %p45
        %p274 = pneg %p42
        %p275 = pneg %p66
        %p276 = pneg %p63
        %p277 = pneg %p87
        %p278 = pneg %p84
        %p279 = pneg %p108
        %p280 = pneg %p105
        %p281 = pneg %p129
        %p282 = pneg %p126
        %p283 = pneg %p155
        %p284 = pneg %p152
        %s285 = sand.u32 %s142, 1
        %s286 = scalar_lea.sflag [#allocation5], %s285
        %s287 = sand.u32 %s142, 1
        %s288 = smul.addr %s287, 16
        %s289 = scalar_lea.vmem [#allocation11], %s288
        %v290 = vld [vmem:[%s247] sm:$0xff]
        %v291 = vld [vmem:[#allocation6] sm:$0xff]
        %v292 = vld [vmem:[#allocation6 + $0x8] sm:$0xff]
        %v293 = vld [vmem:[#allocation6 + $0x10] sm:$0xff]
        %v294 = vld [vmem:[#allocation6 + $0x18] sm:$0xff]
        %v295 = vld [vmem:[#allocation6 + $0x20] sm:$0xff]
        %v296 = vld [vmem:[#allocation6 + $0x28] sm:$0xff]
        %v297 = vld [vmem:[#allocation6 + $0x30] sm:$0xff]
        %v298 = vld [vmem:[#allocation6 + $0x38] sm:$0xff]
        %v299 = vld [vmem:[#allocation6 + $0x40] sm:$0xff]
        %v300 = vld [vmem:[#allocation6 + $0x48] sm:$0xff]
        %v301 = vld [vmem:[#allocation6 + $0x50] sm:$0xff]
        %v302 = vld [vmem:[#allocation6 + $0x58] sm:$0xff]
        %v303 = vld [vmem:[#allocation6 + $0x60] sm:$0xff]
        %v304 = vld [vmem:[#allocation6 + $0x68] sm:$0xff]
        %v305 = vld [vmem:[#allocation6 + $0x70] sm:$0xff]
        %v306 = vld [vmem:[#allocation6 + $0x78] sm:$0xff]
        %v307 = vld [vmem:[#allocation8] sm:$0xf]
        %v309 = vperm.slane %v307, 0
        %v310 = vperm.slane %v307, 1
        %v311 = vperm.slane %v307, 2
        %v312 = vperm.slane %v307, 3
        %vm317 = vcmask 261120
        %v319 = vsel %vm317, %v290, 0
        %321 = vmatpush.msra.mxu0 0.0
        %322 = vmatpush.msra.mxu0 0.0
        %323 = vmatpush.msra.mxu0 0.0
        %324 = vmatpush.msra.mxu0 0.0
        %325 = vmatpush.msra.mxu0 0.0
        %326 = vmatpush.msra.mxu0 0.0
        %327 = vmatpush.msra.mxu0 0.0
        %328 = vmatpush.msra.mxu0 0.0
        %329 = vmatpush.msra.mxu0 0.0
        %330 = vmatpush.msra.mxu0 0.0
        %331 = vmatpush.msra.mxu0 0.0
        %332 = vmatpush.msra.mxu0 0.0
        %333 = vmatpush.msra.mxu0 %v303
        %334 = vmatpush.msra.mxu0 %v299
        %335 = vmatpush.msra.mxu0 %v295
        %336 = vmatpush.msra.mxu0 %v291
        %337 = vmatmul.f32.gmra.mxu0 %v319
        %v338 = vpop.f32.mrf.mxu0
        %v339 = vadd.f32 %v309, %v338
        %340 = vdwg.mxu0
        %341 = vmatpush.msra.mxu0 0.0
        %342 = vmatpush.msra.mxu0 0.0
        %343 = vmatpush.msra.mxu0 0.0
        %344 = vmatpush.msra.mxu0 0.0
        %345 = vmatpush.msra.mxu0 0.0
        %346 = vmatpush.msra.mxu0 0.0
        %347 = vmatpush.msra.mxu0 0.0
        %348 = vmatpush.msra.mxu0 0.0
        %349 = vmatpush.msra.mxu0 0.0
        %350 = vmatpush.msra.mxu0 0.0
        %351 = vmatpush.msra.mxu0 0.0
        %352 = vmatpush.msra.mxu0 0.0
        %353 = vmatpush.msra.mxu0 %v304
        %354 = vmatpush.msra.mxu0 %v300
        %355 = vmatpush.msra.mxu0 %v296
        %356 = vmatpush.msra.mxu0 %v292
        %357 = vmatmul.f32.gmra.mxu0 %v319
        %v358 = vpop.f32.mrf.mxu0
        %v359 = vadd.f32 %v310, %v358
        %360 = vdwg.mxu0
        %361 = vmatpush.msra.mxu0 0.0
        %362 = vmatpush.msra.mxu0 0.0
        %363 = vmatpush.msra.mxu0 0.0
        %364 = vmatpush.msra.mxu0 0.0
        %365 = vmatpush.msra.mxu0 0.0
        %366 = vmatpush.msra.mxu0 0.0
        %367 = vmatpush.msra.mxu0 0.0
        %368 = vmatpush.msra.mxu0 0.0
        %369 = vmatpush.msra.mxu0 0.0
        %370 = vmatpush.msra.mxu0 0.0
        %371 = vmatpush.msra.mxu0 0.0
        %372 = vmatpush.msra.mxu0 0.0
        %373 = vmatpush.msra.mxu0 %v305
        %374 = vmatpush.msra.mxu0 %v301
        %375 = vmatpush.msra.mxu0 %v297
        %376 = vmatpush.msra.mxu0 %v293
        %377 = vmatmul.f32.gmra.mxu0 %v319
        %v378 = vpop.f32.mrf.mxu0
        %v379 = vadd.f32 %v311, %v378
        %380 = vdwg.mxu0
        %381 = vmatpush.msra.mxu0 0.0
        %382 = vmatpush.msra.mxu0 0.0
        %383 = vmatpush.msra.mxu0 0.0
        %384 = vmatpush.msra.mxu0 0.0
        %385 = vmatpush.msra.mxu0 0.0
        %386 = vmatpush.msra.mxu0 0.0
        %387 = vmatpush.msra.mxu0 0.0
        %388 = vmatpush.msra.mxu0 0.0
        %389 = vmatpush.msra.mxu0 0.0
        %390 = vmatpush.msra.mxu0 0.0
        %391 = vmatpush.msra.mxu0 0.0
        %392 = vmatpush.msra.mxu0 0.0
        %393 = vmatpush.msra.mxu0 %v306
        %394 = vmatpush.msra.mxu0 %v302
        %395 = vmatpush.msra.mxu0 %v298
        %396 = vmatpush.msra.mxu0 %v294
        %397 = vmatmul.f32.gmra.mxu0 %v319
        %v398 = vpop.f32.mrf.mxu0
        %v399 = vadd.f32 %v312, %v398
        %400 = vdwg.mxu0
        %v401 = vmax.f32 %v339, 0.0
        %v402 = vmax.f32 %v359, 0.0
        %v403 = vmax.f32 %v379, 0.0
        %v404 = vmax.f32 %v399, 0.0
        %405 = vst [vmem:[#allocation2] sm:$0xff] %v401
        %406 = vst [vmem:[#allocation2 + $0x8] sm:$0xff] %v402
        %407 = vst [vmem:[#allocation2 + $0x10] sm:$0xff] %v403
        %408 = vst [vmem:[#allocation2 + $0x18] sm:$0xff] %v404
        %v409 = vld [vmem:[#allocation2] sm:$0xff]
        %v410 = vld [vmem:[#allocation2 + $0x8] sm:$0xff]
        %v411 = vld [vmem:[#allocation2 + $0x10] sm:$0xff]
        %v412 = vld [vmem:[#allocation2 + $0x18] sm:$0xff]
        %v413 = vld [vmem:[#allocation9] sm:$0xff]
        %v414 = vld [vmem:[#allocation9 + $0x8] sm:$0xff]
        %v415 = vld [vmem:[#allocation9 + $0x10] sm:$0xff]
        %v416 = vld [vmem:[#allocation9 + $0x18] sm:$0xff]
        %v417 = vld [vmem:[#allocation9 + $0x20] sm:$0xff]
        %v418 = vld [vmem:[#allocation9 + $0x28] sm:$0xff]
        %v419 = vld [vmem:[#allocation9 + $0x30] sm:$0xff]
        %v420 = vld [vmem:[#allocation9 + $0x38] sm:$0xff]
        %v421 = vld [vmem:[#allocation9 + $0x40] sm:$0xff]
        %v422 = vld [vmem:[#allocation9 + $0x48] sm:$0xff]
        %v423 = vld [vmem:[#allocation9 + $0x50] sm:$0xff]
        %v424 = vld [vmem:[#allocation9 + $0x58] sm:$0xff]
        %v425 = vld [vmem:[#allocation9 + $0x60] sm:$0xff]
        %v426 = vld [vmem:[#allocation9 + $0x68] sm:$0xff]
        %v427 = vld [vmem:[#allocation9 + $0x70] sm:$0xff]
        %v428 = vld [vmem:[#allocation9 + $0x78] sm:$0xff]
        %v429 = vld [vmem:[#allocation9 + $0x80] sm:$0xff]
        %v430 = vld [vmem:[#allocation9 + $0x88] sm:$0xff]
        %v431 = vld [vmem:[#allocation9 + $0x90] sm:$0xff]
        %v432 = vld [vmem:[#allocation9 + $0x98] sm:$0xff]
        %v433 = vld [vmem:[#allocation9 + $0xa0] sm:$0xff]
        %v434 = vld [vmem:[#allocation9 + $0xa8] sm:$0xff]
        %v435 = vld [vmem:[#allocation9 + $0xb0] sm:$0xff]
        %v436 = vld [vmem:[#allocation9 + $0xb8] sm:$0xff]
        %v437 = vld [vmem:[#allocation9 + $0xc0] sm:$0xff]
        %v438 = vld [vmem:[#allocation9 + $0xc8] sm:$0xff]
        %v439 = vld [vmem:[#allocation9 + $0xd0] sm:$0xff]
        %v440 = vld [vmem:[#allocation9 + $0xd8] sm:$0xff]
        %v441 = vld [vmem:[#allocation9 + $0xe0] sm:$0xff]
        %v442 = vld [vmem:[#allocation9 + $0xe8] sm:$0xff]
        %v443 = vld [vmem:[#allocation9 + $0xf0] sm:$0xff]
        %v444 = vld [vmem:[#allocation9 + $0xf8] sm:$0xff]
        %v445 = vld [vmem:[#allocation9 + $0x100] sm:$0xff]
        %v446 = vld [vmem:[#allocation9 + $0x108] sm:$0xff]
        %v447 = vld [vmem:[#allocation9 + $0x110] sm:$0xff]
        %v448 = vld [vmem:[#allocation9 + $0x118] sm:$0xff]
        %v449 = vld [vmem:[#allocation9 + $0x120] sm:$0xff]
        %v450 = vld [vmem:[#allocation9 + $0x128] sm:$0xff]
        %v451 = vld [vmem:[#allocation9 + $0x130] sm:$0xff]
        %v452 = vld [vmem:[#allocation9 + $0x138] sm:$0xff]
        %v453 = vld [vmem:[#allocation9 + $0x140] sm:$0xff]
        %v454 = vld [vmem:[#allocation9 + $0x148] sm:$0xff]
        %v455 = vld [vmem:[#allocation9 + $0x150] sm:$0xff]
        %v456 = vld [vmem:[#allocation9 + $0x158] sm:$0xff]
        %v457 = vld [vmem:[#allocation9 + $0x160] sm:$0xff]
        %v458 = vld [vmem:[#allocation9 + $0x168] sm:$0xff]
        %v459 = vld [vmem:[#allocation9 + $0x170] sm:$0xff]
        %v460 = vld [vmem:[#allocation9 + $0x178] sm:$0xff]
        %v461 = vld [vmem:[#allocation9 + $0x180] sm:$0xff]
        %v462 = vld [vmem:[#allocation9 + $0x188] sm:$0xff]
        %v463 = vld [vmem:[#allocation9 + $0x190] sm:$0xff]
        %v464 = vld [vmem:[#allocation9 + $0x198] sm:$0xff]
        %v465 = vld [vmem:[#allocation9 + $0x1a0] sm:$0xff]
        %v466 = vld [vmem:[#allocation9 + $0x1a8] sm:$0xff]
        %v467 = vld [vmem:[#allocation9 + $0x1b0] sm:$0xff]
        %v468 = vld [vmem:[#allocation9 + $0x1b8] sm:$0xff]
        %v469 = vld [vmem:[#allocation9 + $0x1c0] sm:$0xff]
        %v470 = vld [vmem:[#allocation9 + $0x1c8] sm:$0xff]
        %v471 = vld [vmem:[#allocation9 + $0x1d0] sm:$0xff]
        %v472 = vld [vmem:[#allocation9 + $0x1d8] sm:$0xff]
        %v473 = vld [vmem:[#allocation9 + $0x1e0] sm:$0xff]
        %v474 = vld [vmem:[#allocation9 + $0x1e8] sm:$0xff]
        %v475 = vld [vmem:[#allocation9 + $0x1f0] sm:$0xff]
        %v476 = vld [vmem:[#allocation9 + $0x1f8] sm:$0xff]
        %v477 = vld [vmem:[#allocation9 + $0x200] sm:$0xff]
        %v478 = vld [vmem:[#allocation9 + $0x208] sm:$0xff]
        %v479 = vld [vmem:[#allocation9 + $0x210] sm:$0xff]
        %v480 = vld [vmem:[#allocation9 + $0x218] sm:$0xff]
        %v481 = vld [vmem:[#allocation9 + $0x220] sm:$0xff]
        %v482 = vld [vmem:[#allocation9 + $0x228] sm:$0xff]
        %v483 = vld [vmem:[#allocation9 + $0x230] sm:$0xff]
        %v484 = vld [vmem:[#allocation9 + $0x238] sm:$0xff]
        %v485 = vld [vmem:[#allocation9 + $0x240] sm:$0xff]
        %v486 = vld [vmem:[#allocation9 + $0x248] sm:$0xff]
        %v487 = vld [vmem:[#allocation9 + $0x250] sm:$0xff]
        %v488 = vld [vmem:[#allocation9 + $0x258] sm:$0xff]
        %v489 = vld [vmem:[#allocation9 + $0x260] sm:$0xff]
        %v490 = vld [vmem:[#allocation9 + $0x268] sm:$0xff]
        %v491 = vld [vmem:[#allocation9 + $0x270] sm:$0xff]
        %v492 = vld [vmem:[#allocation9 + $0x278] sm:$0xff]
        %v493 = vld [vmem:[#allocation9 + $0x280] sm:$0xff]
        %v494 = vld [vmem:[#allocation9 + $0x288] sm:$0xff]
        %v495 = vld [vmem:[#allocation9 + $0x290] sm:$0xff]
        %v496 = vld [vmem:[#allocation9 + $0x298] sm:$0xff]
        %v497 = vld [vmem:[#allocation9 + $0x2a0] sm:$0xff]
        %v498 = vld [vmem:[#allocation9 + $0x2a8] sm:$0xff]
        %v499 = vld [vmem:[#allocation9 + $0x2b0] sm:$0xff]
        %v500 = vld [vmem:[#allocation9 + $0x2b8] sm:$0xff]
        %v501 = vld [vmem:[#allocation9 + $0x2c0] sm:$0xff]
        %v502 = vld [vmem:[#allocation9 + $0x2c8] sm:$0xff]
        %v503 = vld [vmem:[#allocation9 + $0x2d0] sm:$0xff]
        %v504 = vld [vmem:[#allocation9 + $0x2d8] sm:$0xff]
        %v505 = vld [vmem:[#allocation9 + $0x2e0] sm:$0xff]
        %v506 = vld [vmem:[#allocation9 + $0x2e8] sm:$0xff]
        %v507 = vld [vmem:[#allocation9 + $0x2f0] sm:$0xff]
        %v508 = vld [vmem:[#allocation9 + $0x2f8] sm:$0xff]
        %v509 = vld [vmem:[#allocation9 + $0x300] sm:$0xff]
        %v510 = vld [vmem:[#allocation9 + $0x308] sm:$0xff]
        %v511 = vld [vmem:[#allocation9 + $0x310] sm:$0xff]
        %v512 = vld [vmem:[#allocation9 + $0x318] sm:$0xff]
        %v513 = vld [vmem:[#allocation9 + $0x320] sm:$0xff]
        %v514 = vld [vmem:[#allocation9 + $0x328] sm:$0xff]
        %v515 = vld [vmem:[#allocation9 + $0x330] sm:$0xff]
        %v516 = vld [vmem:[#allocation9 + $0x338] sm:$0xff]
        %v517 = vld [vmem:[#allocation9 + $0x340] sm:$0xff]
        %v518 = vld [vmem:[#allocation9 + $0x348] sm:$0xff]
        %v519 = vld [vmem:[#allocation9 + $0x350] sm:$0xff]
        %v520 = vld [vmem:[#allocation9 + $0x358] sm:$0xff]
        %v521 = vld [vmem:[#allocation9 + $0x360] sm:$0xff]
        %v522 = vld [vmem:[#allocation9 + $0x368] sm:$0xff]
        %v523 = vld [vmem:[#allocation9 + $0x370] sm:$0xff]
        %v524 = vld [vmem:[#allocation9 + $0x378] sm:$0xff]
        %v525 = vld [vmem:[#allocation9 + $0x380] sm:$0xff]
        %v526 = vld [vmem:[#allocation9 + $0x388] sm:$0xff]
        %v527 = vld [vmem:[#allocation9 + $0x390] sm:$0xff]
        %v528 = vld [vmem:[#allocation9 + $0x398] sm:$0xff]
        %v529 = vld [vmem:[#allocation9 + $0x3a0] sm:$0xff]
        %v530 = vld [vmem:[#allocation9 + $0x3a8] sm:$0xff]
        %v531 = vld [vmem:[#allocation9 + $0x3b0] sm:$0xff]
        %v532 = vld [vmem:[#allocation9 + $0x3b8] sm:$0xff]
        %v533 = vld [vmem:[#allocation9 + $0x3c0] sm:$0xff]
        %v534 = vld [vmem:[#allocation9 + $0x3c8] sm:$0xff]
        %v535 = vld [vmem:[#allocation9 + $0x3d0] sm:$0xff]
        %v536 = vld [vmem:[#allocation9 + $0x3d8] sm:$0xff]
        %v537 = vld [vmem:[#allocation9 + $0x3e0] sm:$0xff]
        %v538 = vld [vmem:[#allocation9 + $0x3e8] sm:$0xff]
        %v539 = vld [vmem:[#allocation9 + $0x3f0] sm:$0xff]
        %v540 = vld [vmem:[#allocation9 + $0x3f8] sm:$0xff]
        %v541 = vld [vmem:[%s4] sm:$0x3]
        %v543 = vperm.slane %v541, 0
        %v544 = vperm.slane %v541, 1
        %547 = vmatpush.msra.mxu0 %v443
        %548 = vmatpush.msra.mxu0 %v441
        %549 = vmatpush.msra.mxu0 %v439
        %550 = vmatpush.msra.mxu0 %v437
        %551 = vmatpush.msra.mxu0 %v435
        %552 = vmatpush.msra.mxu0 %v433
        %553 = vmatpush.msra.mxu0 %v431
        %554 = vmatpush.msra.mxu0 %v429
        %555 = vmatpush.msra.mxu0 %v427
        %556 = vmatpush.msra.mxu0 %v425
        %557 = vmatpush.msra.mxu0 %v423
        %558 = vmatpush.msra.mxu0 %v421
        %559 = vmatpush.msra.mxu0 %v419
        %560 = vmatpush.msra.mxu0 %v417
        %561 = vmatpush.msra.mxu0 %v415
        %562 = vmatpush.msra.mxu0 %v413
        %563 = vmatmul.f32.gmra.mxu0 %v409
        %v564 = vpop.f32.mrf.mxu0
        %v565 = vadd.f32 %v543, %v564
        %566 = vdwg.mxu0
        %567 = vmatpush.msra.mxu0 %v475
        %568 = vmatpush.msra.mxu0 %v473
        %569 = vmatpush.msra.mxu0 %v471
        %570 = vmatpush.msra.mxu0 %v469
        %571 = vmatpush.msra.mxu0 %v467
        %572 = vmatpush.msra.mxu0 %v465
        %573 = vmatpush.msra.mxu0 %v463
        %574 = vmatpush.msra.mxu0 %v461
        %575 = vmatpush.msra.mxu0 %v459
        %576 = vmatpush.msra.mxu0 %v457
        %577 = vmatpush.msra.mxu0 %v455
        %578 = vmatpush.msra.mxu0 %v453
        %579 = vmatpush.msra.mxu0 %v451
        %580 = vmatpush.msra.mxu0 %v449
        %581 = vmatpush.msra.mxu0 %v447
        %582 = vmatpush.msra.mxu0 %v445
        %583 = vmatmul.f32.gmra.mxu0 %v410
        %v584 = vpop.f32.mrf.mxu0
        %v585 = vadd.f32 %v565, %v584
        %586 = vdwg.mxu0
        %587 = vmatpush.msra.mxu0 %v507
        %588 = vmatpush.msra.mxu0 %v505
        %589 = vmatpush.msra.mxu0 %v503
        %590 = vmatpush.msra.mxu0 %v501
        %591 = vmatpush.msra.mxu0 %v499
        %592 = vmatpush.msra.mxu0 %v497
        %593 = vmatpush.msra.mxu0 %v495
        %594 = vmatpush.msra.mxu0 %v493
        %595 = vmatpush.msra.mxu0 %v491
        %596 = vmatpush.msra.mxu0 %v489
        %597 = vmatpush.msra.mxu0 %v487
        %598 = vmatpush.msra.mxu0 %v485
        %599 = vmatpush.msra.mxu0 %v483
        %600 = vmatpush.msra.mxu0 %v481
        %601 = vmatpush.msra.mxu0 %v479
        %602 = vmatpush.msra.mxu0 %v477
        %603 = vmatmul.f32.gmra.mxu0 %v411
        %v604 = vpop.f32.mrf.mxu0
        %v605 = vadd.f32 %v585, %v604
        %606 = vdwg.mxu0
        %607 = vmatpush.msra.mxu0 %v539
        %608 = vmatpush.msra.mxu0 %v537
        %609 = vmatpush.msra.mxu0 %v535
        %610 = vmatpush.msra.mxu0 %v533
        %611 = vmatpush.msra.mxu0 %v531
        %612 = vmatpush.msra.mxu0 %v529
        %613 = vmatpush.msra.mxu0 %v527
        %614 = vmatpush.msra.mxu0 %v525
        %615 = vmatpush.msra.mxu0 %v523
        %616 = vmatpush.msra.mxu0 %v521
        %617 = vmatpush.msra.mxu0 %v519
        %618 = vmatpush.msra.mxu0 %v517
        %619 = vmatpush.msra.mxu0 %v515
        %620 = vmatpush.msra.mxu0 %v513
        %621 = vmatpush.msra.mxu0 %v511
        %622 = vmatpush.msra.mxu0 %v509
        %623 = vmatmul.f32.gmra.mxu0 %v412
        %v624 = vpop.f32.mrf.mxu0
        %v625 = vadd.f32 %v605, %v624
        %626 = vdwg.mxu0
        %627 = vmatpush.msra.mxu0 %v444
        %628 = vmatpush.msra.mxu0 %v442
        %629 = vmatpush.msra.mxu0 %v440
        %630 = vmatpush.msra.mxu0 %v438
        %631 = vmatpush.msra.mxu0 %v436
        %632 = vmatpush.msra.mxu0 %v434
        %633 = vmatpush.msra.mxu0 %v432
        %634 = vmatpush.msra.mxu0 %v430
        %635 = vmatpush.msra.mxu0 %v428
        %636 = vmatpush.msra.mxu0 %v426
        %637 = vmatpush.msra.mxu0 %v424
        %638 = vmatpush.msra.mxu0 %v422
        %639 = vmatpush.msra.mxu0 %v420
        %640 = vmatpush.msra.mxu0 %v418
        %641 = vmatpush.msra.mxu0 %v416
        %642 = vmatpush.msra.mxu0 %v414
        %643 = vmatmul.f32.gmra.mxu0 %v409
        %v644 = vpop.f32.mrf.mxu0
        %v645 = vadd.f32 %v544, %v644
        %646 = vdwg.mxu0
        %647 = vmatpush.msra.mxu0 %v476
        %648 = vmatpush.msra.mxu0 %v474
        %649 = vmatpush.msra.mxu0 %v472
        %650 = vmatpush.msra.mxu0 %v470
        %651 = vmatpush.msra.mxu0 %v468
        %652 = vmatpush.msra.mxu0 %v466
        %653 = vmatpush.msra.mxu0 %v464
        %654 = vmatpush.msra.mxu0 %v462
        %655 = vmatpush.msra.mxu0 %v460
        %656 = vmatpush.msra.mxu0 %v458
        %657 = vmatpush.msra.mxu0 %v456
        %658 = vmatpush.msra.mxu0 %v454
        %659 = vmatpush.msra.mxu0 %v452
        %660 = vmatpush.msra.mxu0 %v450
        %661 = vmatpush.msra.mxu0 %v448
        %662 = vmatpush.msra.mxu0 %v446
        %663 = vmatmul.f32.gmra.mxu0 %v410
        %v664 = vpop.f32.mrf.mxu0
        %v665 = vadd.f32 %v645, %v664
        %666 = vdwg.mxu0
        %667 = vmatpush.msra.mxu0 %v508
        %668 = vmatpush.msra.mxu0 %v506
        %669 = vmatpush.msra.mxu0 %v504
        %670 = vmatpush.msra.mxu0 %v502
        %671 = vmatpush.msra.mxu0 %v500
        %672 = vmatpush.msra.mxu0 %v498
        %673 = vmatpush.msra.mxu0 %v496
        %674 = vmatpush.msra.mxu0 %v494
        %675 = vmatpush.msra.mxu0 %v492
        %676 = vmatpush.msra.mxu0 %v490
        %677 = vmatpush.msra.mxu0 %v488
        %678 = vmatpush.msra.mxu0 %v486
        %679 = vmatpush.msra.mxu0 %v484
        %680 = vmatpush.msra.mxu0 %v482
        %681 = vmatpush.msra.mxu0 %v480
        %682 = vmatpush.msra.mxu0 %v478
        %683 = vmatmul.f32.gmra.mxu0 %v411
        %v684 = vpop.f32.mrf.mxu0
        %v685 = vadd.f32 %v665, %v684
        %686 = vdwg.mxu0
        %687 = vmatpush.msra.mxu0 %v540
        %688 = vmatpush.msra.mxu0 %v538
        %689 = vmatpush.msra.mxu0 %v536
        %690 = vmatpush.msra.mxu0 %v534
        %691 = vmatpush.msra.mxu0 %v532
        %692 = vmatpush.msra.mxu0 %v530
        %693 = vmatpush.msra.mxu0 %v528
        %694 = vmatpush.msra.mxu0 %v526
        %695 = vmatpush.msra.mxu0 %v524
        %696 = vmatpush.msra.mxu0 %v522
        %697 = vmatpush.msra.mxu0 %v520
        %698 = vmatpush.msra.mxu0 %v518
        %699 = vmatpush.msra.mxu0 %v516
        %700 = vmatpush.msra.mxu0 %v514
        %701 = vmatpush.msra.mxu0 %v512
        %702 = vmatpush.msra.mxu0 %v510
        %703 = vmatmul.f32.gmra.mxu0 %v412
        %v704 = vpop.f32.mrf.mxu0
        %v705 = vadd.f32 %v685, %v704
        %706 = vdwg.mxu0
        %v707 = vmax.f32 %v625, 0.0
        %v708 = vmax.f32 %v705, 0.0
        %709 = vst [vmem:[%s289] sm:$0xff] %v707
        %710 = vst [vmem:[%s289 + $0x8] sm:$0xff] %v708
        %s711 = sand.u32 %s142, 1
        %s712 = scalar_lea.sflag [#allocation5], %s711
        %s713 = sand.u32 %s142, 1
        %s714 = smul.addr %s713, 16
        %s715 = scalar_lea.vmem [#allocation11], %s714
        // Predicated region
        $region57: #{tpu_custom_call.1} parent=39 // pred_check
          %p716 = pneg %p152
        $region58: #{tpu_custom_call.1} parent=39 // pred_check_branch
          %718 = sbr.rel (%p716) target = $region60
        $region59: #{tpu_custom_call.1} parent=39 // pred_region
          %720 = vsyncadd %s712, 0
          %s721 = smul.addr %s24, 2
          %s722 = smul.addr %s721, 8
          %s723 = scalar_lea.hbm %s5, %s722
          %s725 = sshll.u32 %s715, 4
          %s726 = int_to_ptr.vmem [resolvable:$true] %s725
          %s727 = sshll.u32 %s723, 4
          %s728 = int_to_ptr.hbm [resolvable:$true] %s727
          %730 = dma.vmem_to_hbm [thread:$0]  %s726, 256, %s728, %s712
        $region60: #{tpu_custom_call.1} parent=39 // pred_fallthru
          _
      $region40: #{tpu_custom_call.1} parent=5 // pred_fallthru
        _
      %p731 = scmp.le.s32.totalorder 2, %s19
      // Predicated region
      $region61: #{tpu_custom_call.1} parent=5 // pred_check
        %p732 = pneg %p731
      $region62: #{tpu_custom_call.1} parent=5 // pred_check_branch
        %734 = sbr.rel (%p732) target = $region64
      $region63: #{tpu_custom_call.1} parent=5 // pred_region
        %s735 = ssub.s32 %s19, 2
        // Predicated region
        $region65: #{tpu_custom_call.1} parent=63 // pred_check
          %p736 = pneg %p158
        $region66: #{tpu_custom_call.1} parent=63 // pred_check_branch
          %738 = sbr.rel (%p736) target = $region68
        $region67: #{tpu_custom_call.1} parent=63 // pred_region
          %s739 = sand.u32 %s143, 1
          %s740 = scalar_lea.sflag [#allocation5], %s739
          %s741 = sand.u32 %s143, 1
          %s742 = smul.addr %s741, 16
          %s743 = scalar_lea.vmem [#allocation11], %s742
          %745 = dma.done %s740, 256
        $region68: #{tpu_custom_call.1} parent=63 // pred_fallthru
          _
      $region64: #{tpu_custom_call.1} parent=5 // pred_fallthru
        _
    $region6: #{tpu_custom_call.1} parent=1 // loop_footer
      %s23 = sadd.s32 1, %s19
    $region7: #{tpu_custom_call.1} parent=1 // loop_footer_branch
      %18 = sbr.rel target = $region3
    $region8: #{tpu_custom_call.1} parent=1 // loop_exit
      _
    %746 = vsyncpa [#allocation4], 1
    %s747 = scalar_lea.sflag [#allocation4], 1
    %748 = vsyncpa %s747, 1
    %749 = vsyncpa [#allocation7], 1
    %750 = vsyncpa [#allocation10], 1
    %751 = vsyncpa [#allocation5], 1
    %s752 = scalar_lea.sflag [#allocation5], 1
    %753 = vsyncpa %s752, 1

</llo_original>
